<compile_context>
chip_gen: v7x
topology: tpu7x:2x2x1
jax: 0.10.0
libtpu: 0.0.40
codegen_flags: <defaults>
</compile_context>

<pallas_src>
import jax
import jax.numpy as jnp
from jax.experimental import pallas as pl
from jax.experimental.pallas import tpu as pltpu


def _leaky_relu(x, slope=0.2):
    return jnp.where(x > 0, x, slope * x)


def _round_up(x, m):
    return (x + m - 1) // m * m


def discriminator_z_kernel(z_ref, w1_ref, b1_ref, w2_ref, b2_ref,
                           w3_ref, b3_ref, out_ref):
    # Layer 1: (TB, D) @ (D, 256) -- bf16 operands, f32 accumulation on the MXU.
    z = z_ref[...].astype(jnp.bfloat16)
    h1 = jnp.dot(z, w1_ref[...], preferred_element_type=jnp.float32)
    h1 = _leaky_relu(h1 + b1_ref[...])                      # f32 VPU math

    # Layer 2: (TB, 256) @ (256, 128)
    h2 = jnp.dot(h1.astype(jnp.bfloat16), w2_ref[...],
                 preferred_element_type=jnp.float32)
    h2 = _leaky_relu(h2 + b2_ref[...])

    # Layer 3: single output column -> skip the MXU; VPU multiply by the
    # (1, 128) w3 row, reduce along lanes (XLU), add SMEM scalar bias.
    logits = jnp.sum(h2 * w3_ref[...], axis=-1, keepdims=True) + b3_ref[0, 0]
    out_ref[...] = jax.nn.sigmoid(logits).astype(out_ref.dtype)


def discriminator_z(z, params, *, tb=512):
    """z: (batch, input_size) float32. params: dict of w1,b1,w2,b2,w3,b3 (f32).

    Returns (batch, 1) float32, matching the PyTorch module's forward.
    """
    B, D = z.shape
    TB = min(tb, _round_up(B, 8))            # batch tile (multiple of 8 sublanes)
    Bp = _round_up(B, TB)                    # padded batch, multiple of TB
    if Bp != B:
        z = jnp.pad(z, ((0, Bp - B), (0, 0)))

    # Weights streamed/resident as bf16 (halves HBM traffic + VMEM footprint,
    # bf16-native MXU on v5e/v6e/v7x); biases stay f32.
    w1 = params["w1"].astype(jnp.bfloat16)                    # (D, 256)
    w2 = params["w2"].astype(jnp.bfloat16)                    # (256, 128)
    b1 = params["b1"].astype(jnp.float32)                     # (1, 256)
    b2 = params["b2"].astype(jnp.float32)                     # (1, 128)
    w3 = params["w3"].reshape(1, 128).astype(jnp.float32)     # (1, 128) row
    b3 = params["b3"].reshape(1, 1).astype(jnp.float32)       # SMEM scalar

    const = lambda i: (0, 0)                 # weights resident across the grid
    grid = (Bp // TB,)

    # Per-tile VMEM (double-buffered z tile + resident bf16 weights) is well
    # under the scoped default on all of v5e/v6e/v7x; no vmem_limit override.
    out = pl.pallas_call(
        discriminator_z_kernel,
        out_shape=jax.ShapeDtypeStruct((Bp, 1), jnp.float32),
        grid=grid,
        in_specs=[
            pl.BlockSpec((TB, D), lambda i: (i, 0)),           # z: tiled over batch
            pl.BlockSpec(w1.shape, const),                     # resident weights
            pl.BlockSpec(b1.shape, const),
            pl.BlockSpec(w2.shape, const),
            pl.BlockSpec(b2.shape, const),
            pl.BlockSpec(w3.shape, const),
            pl.BlockSpec(memory_space=pltpu.MemorySpace.SMEM), # b3 scalar (1,1)
        ],
        out_specs=pl.BlockSpec((TB, 1), lambda i: (i, 0)),
        compiler_params=pltpu.CompilerParams(
            dimension_semantics=("parallel",)),
    )(z, w1, b1, w2, b2, w3, b3)
    return out[:B]


def init_params(key, input_size):
    """Deterministic init mimicking PyTorch Linear default (U[-1/sqrt(fan_in), +])."""
    ks = jax.random.split(key, 6)

    def lin(kw, kb, fan_in, fan_out):
        bound = 1.0 / (fan_in ** 0.5)
        w = jax.random.uniform(kw, (fan_in, fan_out), jnp.float32, -bound, bound)
        b = jax.random.uniform(kb, (1, fan_out), jnp.float32, -bound, bound)
        return w, b

    w1, b1 = lin(ks[0], ks[1], input_size, 256)
    w2, b2 = lin(ks[2], ks[3], 256, 128)
    w3, b3 = lin(ks[4], ks[5], 128, 1)
    return dict(w1=w1, b1=b1, w2=w2, b2=b2, w3=w3, b3=b3)


def reference(z, p):
    """Full-f32 reference matching the PyTorch forward."""
    h1 = _leaky_relu(z @ p["w1"] + p["b1"])
    h2 = _leaky_relu(h1 @ p["w2"] + p["b2"])
    return jax.nn.sigmoid(h2 @ p["w3"] + p["b3"])


if __name__ == "__main__":
    key = jax.random.PRNGKey(0)
    k_z, k_p, k_z2 = jax.random.split(key, 3)

    input_size = 32
    params = init_params(k_p, input_size)

    # Small case (single tile, grid of 1).
    z_small = jax.random.normal(k_z, (8, input_size), jnp.float32)
    out_small = jax.block_until_ready(discriminator_z(z_small, params))
    ref_small = reference(z_small, params)
    assert out_small.shape == (8, 1)
    # bf16 matmul operands -> compare against f32 reference with loose tolerance.
    assert jnp.allclose(out_small, ref_small, atol=2e-2, rtol=2e-2)

    # Larger case exercising the batch grid + padding path (300 -> pad, tiled).
    z_big = jax.random.normal(k_z2, (300, input_size), jnp.float32)
    out_big = jax.block_until_ready(discriminator_z(z_big, params))
    ref_big = reference(z_big, params)
    assert out_big.shape == (300, 1)
    assert jnp.allclose(out_big, ref_big, atol=2e-2, rtol=2e-2)

    print("KERNEL_OK")
</pallas_src>

<mosaic_0001>
module attributes {stable_mosaic.version = 11 : i64} {
  func.func @discriminator_z_kernel(%arg0: i32, %arg1: memref<8x32xf32, #tpu.memory_space<vmem>>, %arg2: memref<32x256xbf16, #tpu.memory_space<vmem>>, %arg3: memref<1x256xf32, #tpu.memory_space<vmem>>, %arg4: memref<256x128xbf16, #tpu.memory_space<vmem>>, %arg5: memref<1x128xf32, #tpu.memory_space<vmem>>, %arg6: memref<1x128xf32, #tpu.memory_space<vmem>>, %arg7: memref<1x1xf32, #tpu.memory_space<smem>>, %arg8: memref<8x1xf32, #tpu.memory_space<vmem>>) attributes {dimension_semantics = [#tpu.dimension_semantics<parallel>], iteration_bounds = array<i64: 1>, scalar_prefetch = 0 : i64, scratch_operands = 0 : i64, tpu.core_type = #tpu.core_type<tc>, window_params = [{transform_indices = @transform_0, window_bounds = array<i64: 8, 32>}, {pipeline_mode = #tpu.pipeline_mode<synchronous>, transform_indices = @transform_1, window_bounds = array<i64: 32, 256>}, {pipeline_mode = #tpu.pipeline_mode<synchronous>, transform_indices = @transform_2, window_bounds = array<i64: 1, 256>}, {pipeline_mode = #tpu.pipeline_mode<synchronous>, transform_indices = @transform_3, window_bounds = array<i64: 256, 128>}, {pipeline_mode = #tpu.pipeline_mode<synchronous>, transform_indices = @transform_4, window_bounds = array<i64: 1, 128>}, {pipeline_mode = #tpu.pipeline_mode<synchronous>, transform_indices = @transform_5, window_bounds = array<i64: 1, 128>}, {transform_indices = @transform_6, window_bounds = array<i64: 1, 1>}, {transform_indices = @transform_7, window_bounds = array<i64: 8, 1>}]} {
    %c0 = arith.constant 0 : index
    %c0_0 = arith.constant 0 : index
    %0 = vector.load %arg1[%c0, %c0_0] : memref<8x32xf32, #tpu.memory_space<vmem>>, vector<8x32xf32>
    %1 = arith.truncf %0 : vector<8x32xf32> to vector<8x32xbf16>
    %c0_1 = arith.constant 0 : index
    %c0_2 = arith.constant 0 : index
    %2 = vector.load %arg2[%c0_1, %c0_2] : memref<32x256xbf16, #tpu.memory_space<vmem>>, vector<32x256xbf16>
    %cst = arith.constant dense<0.000000e+00> : vector<8x256xf32>
    %3 = tpu.matmul %1, %2, %cst {dimension_numbers = #tpu.dot_dimension_numbers<[1], [0], [0], [1], [0, 0, 1, 1], [], []>} : vector<8x32xbf16>, vector<32x256xbf16>, vector<8x256xf32> -> vector<8x256xf32>
    %c0_3 = arith.constant 0 : index
    %c0_4 = arith.constant 0 : index
    %4 = vector.load %arg3[%c0_3, %c0_4] : memref<1x256xf32, #tpu.memory_space<vmem>>, vector<1x256xf32>
    %5 = vector.broadcast %4 : vector<1x256xf32> to vector<8x256xf32>
    %6 = arith.addf %3, %5 : vector<8x256xf32>
    %cst_5 = arith.constant 0.000000e+00 : f32
    %7 = vector.broadcast %cst_5 : f32 to vector<8x256xf32>
    %8 = arith.cmpf ogt, %6, %7 : vector<8x256xf32>
    %cst_6 = arith.constant 2.000000e-01 : f32
    %9 = vector.broadcast %cst_6 : f32 to vector<8x256xf32>
    %10 = arith.mulf %9, %6 : vector<8x256xf32>
    %11 = arith.select %8, %6, %10 : vector<8x256xi1>, vector<8x256xf32>
    %12 = arith.truncf %11 : vector<8x256xf32> to vector<8x256xbf16>
    %c0_7 = arith.constant 0 : index
    %c0_8 = arith.constant 0 : index
    %13 = vector.load %arg4[%c0_7, %c0_8] : memref<256x128xbf16, #tpu.memory_space<vmem>>, vector<256x128xbf16>
    %cst_9 = arith.constant dense<0.000000e+00> : vector<8x128xf32>
    %14 = tpu.matmul %12, %13, %cst_9 {dimension_numbers = #tpu.dot_dimension_numbers<[1], [0], [0], [1], [0, 0, 1, 1], [], []>} : vector<8x256xbf16>, vector<256x128xbf16>, vector<8x128xf32> -> vector<8x128xf32>
    %c0_10 = arith.constant 0 : index
    %c0_11 = arith.constant 0 : index
    %15 = vector.load %arg5[%c0_10, %c0_11] : memref<1x128xf32, #tpu.memory_space<vmem>>, vector<1x128xf32>
    %16 = vector.broadcast %15 : vector<1x128xf32> to vector<8x128xf32>
    %17 = arith.addf %14, %16 : vector<8x128xf32>
    %cst_12 = arith.constant 0.000000e+00 : f32
    %18 = vector.broadcast %cst_12 : f32 to vector<8x128xf32>
    %19 = arith.cmpf ogt, %17, %18 : vector<8x128xf32>
    %cst_13 = arith.constant 2.000000e-01 : f32
    %20 = vector.broadcast %cst_13 : f32 to vector<8x128xf32>
    %21 = arith.mulf %20, %17 : vector<8x128xf32>
    %22 = arith.select %19, %17, %21 : vector<8x128xi1>, vector<8x128xf32>
    %c0_14 = arith.constant 0 : index
    %c0_15 = arith.constant 0 : index
    %23 = vector.load %arg6[%c0_14, %c0_15] : memref<1x128xf32, #tpu.memory_space<vmem>>, vector<1x128xf32>
    %24 = vector.broadcast %23 : vector<1x128xf32> to vector<8x128xf32>
    %25 = arith.mulf %22, %24 : vector<8x128xf32>
    %cst_16 = arith.constant dense<0.000000e+00> : vector<8xf32>
    %26 = vector.multi_reduction <add>, %25, %cst_16 [1] : vector<8x128xf32> to vector<8xf32>
    %27 = vector.shape_cast %26 : vector<8xf32> to vector<8x1xf32>
    %c0_17 = arith.constant 0 : index
    %c0_18 = arith.constant 0 : index
    %28 = memref.load %arg7[%c0_17, %c0_18] : memref<1x1xf32, #tpu.memory_space<smem>>
    %29 = vector.broadcast %28 : f32 to vector<8x1xf32>
    %30 = arith.addf %27, %29 : vector<8x1xf32>
    %31 = arith.negf %30 : vector<8x1xf32>
    %32 = math.exp %31 : vector<8x1xf32>
    %cst_19 = arith.constant 1.000000e+00 : f32
    %33 = vector.broadcast %cst_19 : f32 to vector<8x1xf32>
    %34 = arith.addf %33, %32 : vector<8x1xf32>
    %35 = arith.divf %33, %34 : vector<8x1xf32>
    %c0_20 = arith.constant 0 : index
    %c0_21 = arith.constant 0 : index
    %36 = vector.load %arg8[%c0_20, %c0_21] : memref<8x1xf32, #tpu.memory_space<vmem>>, vector<8x1xf32>
    tpu.vector_store %arg8[%c0_20, %c0_21], %35 {strides = array<i32>} : memref<8x1xf32, #tpu.memory_space<vmem>>, vector<8x1xf32>,
    return
  }
  func.func @transform_0(%arg0: i32) -> (i32, i32) {
    %c0_i32 = arith.constant 0 : i32
    %c0_i32_0 = arith.constant 0 : i32
    return %arg0, %c0_i32 : i32, i32
  }
  func.func @transform_1(%arg0: i32) -> (i32, i32) {
    %c0_i32 = arith.constant 0 : i32
    %c0_i32_0 = arith.constant 0 : i32
    %c0_i32_1 = arith.constant 0 : i32
    return %c0_i32, %c0_i32_0 : i32, i32
  }
  func.func @transform_2(%arg0: i32) -> (i32, i32) {
    %c0_i32 = arith.constant 0 : i32
    %c0_i32_0 = arith.constant 0 : i32
    %c0_i32_1 = arith.constant 0 : i32
    return %c0_i32, %c0_i32_0 : i32, i32
  }
  func.func @transform_3(%arg0: i32) -> (i32, i32) {
    %c0_i32 = arith.constant 0 : i32
    %c0_i32_0 = arith.constant 0 : i32
    %c0_i32_1 = arith.constant 0 : i32
    return %c0_i32, %c0_i32_0 : i32, i32
  }
  func.func @transform_4(%arg0: i32) -> (i32, i32) {
    %c0_i32 = arith.constant 0 : i32
    %c0_i32_0 = arith.constant 0 : i32
    %c0_i32_1 = arith.constant 0 : i32
    return %c0_i32, %c0_i32_0 : i32, i32
  }
  func.func @transform_5(%arg0: i32) -> (i32, i32) {
    %c0_i32 = arith.constant 0 : i32
    %c0_i32_0 = arith.constant 0 : i32
    %c0_i32_1 = arith.constant 0 : i32
    return %c0_i32, %c0_i32_0 : i32, i32
  }
  func.func @transform_6(%arg0: i32) -> (i32, i32) {
    %c0_i32 = arith.constant 0 : i32
    %c0_i32_0 = arith.constant 0 : i32
    %c0_i32_1 = arith.constant 0 : i32
    return %c0_i32, %c0_i32_0 : i32, i32
  }
  func.func @transform_7(%arg0: i32) -> (i32, i32) {
    %c0_i32 = arith.constant 0 : i32
    %c0_i32_0 = arith.constant 0 : i32
    return %arg0, %c0_i32 : i32, i32
  }
}

</mosaic_0001>

<llo_original>
// kernel: tpu_custom_call.1
$region0: #{tpu_custom_call.1}
  #allocation0 [shape = 'u32[]', space=smem, size = 0x4, offset = 0x4, fixed_abs, tag = 'smem constant byte address 0x4 - core index']
  #allocation1 [shape = 'u32[144,128]{1,0:T(1,128)}', space=vmem, size = 0x12000, scoped, tag = 'internal scratch']
  #allocation2 [shape = 'f32[1,1]{1,0:T(1,128)S(6)}', space=smem, size = 0x200, scoped, tag = 'scoped memory for tpu_custom_call.1']
  %s0 = inlined_call_operand.hbm [shape: f32[8,32], index: 0, kind: input, shape index: {}]
  %s1 = inlined_call_operand.hbm [shape: bf16[32,256], index: 1, kind: input, shape index: {}]
  %s2 = inlined_call_operand.vmem [shape: f32[1,256], index: 2, kind: input, shape index: {}]
  %s3 = inlined_call_operand.hbm [shape: bf16[256,128], index: 3, kind: input, shape index: {}]
  %s4 = inlined_call_operand.vmem [shape: f32[1,128], index: 4, kind: input, shape index: {}]
  %s5 = inlined_call_operand.vmem [shape: f32[1,128], index: 5, kind: input, shape index: {}]
  %s6 = inlined_call_operand.<no memory space> [shape: f32[1,1], index: 6, kind: input, shape index: {}]
  %s7 = inlined_call_operand.vmem [shape: f32[8,1], index: 7, kind: output, shape index: {}]
  %s8 = sld [smem:[#allocation0]]
  $region50: #{tpu_custom_call.1} parent=0
    _
  %s10 = ssub.s32 1, %s8
  %s11 = scalar_select 0, %s10, %s8
  %12 = sst [smem:[#allocation2]] %s6
  $region1: #{tpu_custom_call.1} parent=0
    #allocation3 [shape = 'u8[4096]{0}', space=vmem, size = 0x1000, scoped, tag = 'input window, operand 0, single buffered']
    #allocation4 [shape = 's32[1]{0}', space=sflag, size = 0x4, scoped, tag = 'scoped memory for tpu_custom_call.1']
    #allocation5 [shape = 'u8[16384]{0}', space=vmem, size = 0x4000, scoped, tag = 'input window, operand 1, single buffered']
    #allocation6 [shape = 's32[1]{0}', space=sflag, size = 0x4, scoped, tag = 'scoped memory for tpu_custom_call.1']
    #allocation7 [shape = 'u8[65536]{0}', space=vmem, size = 0x10000, scoped, tag = 'input window, operand 3, single buffered']
    %13 = vsyncpa [#allocation4], 0
    %14 = vsyncpa [#allocation6], 0
    // Predicated region
    $region2: #{tpu_custom_call.1} parent=1 // pred_check
      _
    $region3: #{tpu_custom_call.1} parent=1 // pred_check_branch
      %16 = sbr.rel (0) target = $region5
    $region4: #{tpu_custom_call.1} parent=1 // pred_region
      %s18 = ssub.s32 128, 128
      %19 = vsyncadd [#allocation4], %s18
      %s21 = sshll.u32 [#allocation3], 4
      %s22 = int_to_ptr.vmem [resolvable:$true] %s21
      %24 = dma.hbm_to_vmem [thread:$0]  %s0, 128, %s22, [#allocation4]
    $region5: #{tpu_custom_call.1} parent=1 // pred_fallthru
      _
    // Predicated region
    $region6: #{tpu_custom_call.1} parent=1 // pred_check
      _
    $region7: #{tpu_custom_call.1} parent=1 // pred_check_branch
      %26 = sbr.rel (0) target = $region9
    $region8: #{tpu_custom_call.1} parent=1 // pred_region
      %s28 = ssub.s32 512, 512
      %29 = vsyncadd [#allocation6], %s28
      %s30 = sshll.u32 [#allocation5], 4
      %s31 = int_to_ptr.vmem [resolvable:$true] %s30
      %36 = dma.hbm_to_vmem [thread:$0]  %s1, 512, %s31, [#allocation6], 128, 128, 8
    $region9: #{tpu_custom_call.1} parent=1 // pred_fallthru
      _
    // Predicated region
    $region10: #{tpu_custom_call.1} parent=1 // pred_check
      _
    $region11: #{tpu_custom_call.1} parent=1 // pred_check_branch
      %38 = sbr.rel (0) target = $region13
    $region12: #{tpu_custom_call.1} parent=1 // pred_region
      _
    $region13: #{tpu_custom_call.1} parent=1 // pred_fallthru
      _
    // Predicated region
    $region14: #{tpu_custom_call.1} parent=1 // pred_check
      _
    $region15: #{tpu_custom_call.1} parent=1 // pred_check_branch
      %40 = sbr.rel (0) target = $region17
    $region16: #{tpu_custom_call.1} parent=1 // pred_region
      %s42 = ssub.s32 2048, 2048
      %43 = vsyncadd [#allocation6], %s42
      %s44 = sshll.u32 [#allocation7], 4
      %s45 = int_to_ptr.vmem [resolvable:$true] %s44
      %50 = dma.hbm_to_vmem [thread:$0]  %s3, 2048, %s45, [#allocation6], 64, 64, 4
    $region17: #{tpu_custom_call.1} parent=1 // pred_fallthru
      _
    // Predicated region
    $region18: #{tpu_custom_call.1} parent=1 // pred_check
      _
    $region19: #{tpu_custom_call.1} parent=1 // pred_check_branch
      %52 = sbr.rel (0) target = $region21
    $region20: #{tpu_custom_call.1} parent=1 // pred_region
      _
    $region21: #{tpu_custom_call.1} parent=1 // pred_fallthru
      _
    // Predicated region
    $region22: #{tpu_custom_call.1} parent=1 // pred_check
      _
    $region23: #{tpu_custom_call.1} parent=1 // pred_check_branch
      %54 = sbr.rel (0) target = $region25
    $region24: #{tpu_custom_call.1} parent=1 // pred_region
      _
    $region25: #{tpu_custom_call.1} parent=1 // pred_fallthru
      _
    // Predicated region
    $region26: #{tpu_custom_call.1} parent=1 // pred_check
      _
    $region27: #{tpu_custom_call.1} parent=1 // pred_check_branch
      %56 = sbr.rel (0) target = $region29
    $region28: #{tpu_custom_call.1} parent=1 // pred_region
      _
    $region29: #{tpu_custom_call.1} parent=1 // pred_fallthru
      _
    // Predicated region
    $region30: #{tpu_custom_call.1} parent=1 // pred_check
      _
    $region31: #{tpu_custom_call.1} parent=1 // pred_check_branch
      %58 = sbr.rel (0) target = $region33
    $region32: #{tpu_custom_call.1} parent=1 // pred_region
      %59 = dma.done [#allocation4], 128
    $region33: #{tpu_custom_call.1} parent=1 // pred_fallthru
      _
    // Predicated region
    $region34: #{tpu_custom_call.1} parent=1 // pred_check
      _
    $region35: #{tpu_custom_call.1} parent=1 // pred_check_branch
      %61 = sbr.rel (0) target = $region37
    $region36: #{tpu_custom_call.1} parent=1 // pred_region
      %62 = dma.done [#allocation6], 512
    $region37: #{tpu_custom_call.1} parent=1 // pred_fallthru
      _
    // Predicated region
    $region38: #{tpu_custom_call.1} parent=1 // pred_check
      _
    $region39: #{tpu_custom_call.1} parent=1 // pred_check_branch
      %64 = sbr.rel (0) target = $region41
    $region40: #{tpu_custom_call.1} parent=1 // pred_region
      %65 = dma.done [#allocation6], 2048
    $region41: #{tpu_custom_call.1} parent=1 // pred_fallthru
      _
    %v67 = vld [vmem:[#allocation3] sm:$0xff]
    %v68 = vpack.c.bf16 %v67, %v67
    %v69 = vld [vmem:[#allocation5] sm:$0xff]
    %v70 = vld [vmem:[#allocation5 + $0x8] sm:$0xff]
    %v71 = vld [vmem:[#allocation5 + $0x10] sm:$0xff]
    %v72 = vld [vmem:[#allocation5 + $0x18] sm:$0xff]
    %v73 = vld [vmem:[%s2] sm:$0x3]
    %v75 = vlaneseq
    %v76 = vshrl.u32 %v75, 7
    %v77 = vsub.s32 0, %v76
    %v78 = vrot.slane %v73, %v77
    %v79 = vlaneseq
    %v80 = vshrl.u32 %v79, 7
    %v81 = vsub.s32 1, %v80
    %v82 = vrot.slane %v73, %v81
    %v89 = vunpack.c.l.b16 %v69
    %v90 = vunpack.c.h.b16 %v69
    %v91 = vunpack.c.l.b16 %v70
    %v92 = vunpack.c.h.b16 %v70
    %v93 = vunpack.c.l.b16 %v71
    %v94 = vunpack.c.h.b16 %v71
    %v95 = vunpack.c.l.b16 %v72
    %v96 = vunpack.c.h.b16 %v72
    %v97 = vpack.c.b16 %v91, %v89
    %v98 = vpack.c.b16 %v92, %v90
    %v99 = vpack.c.b16 %v95, %v93
    %v100 = vpack.c.b16 %v96, %v94
    %vm105 = vcmask 261120
    %v107 = vsel %vm105, %v68, 0
    %109 = vmatprep.subr.bf16.mxu0 %v98
    %110 = vmatpush1.bf16.msra.mxu0 %v97
    %111 = vmatprep.subr.bf16.mxu0 %v100
    %112 = vmatpush1.bf16.msra.mxu0 %v99
    %113 = vmatprep.subr.bf16.mxu0 0
    %114 = vmatpush1.bf16.msra.mxu0 0
    %115 = vmatprep.subr.bf16.mxu0 0
    %116 = vmatpush1.bf16.msra.mxu0 0
    %117 = vmatprep.subr.bf16.mxu0 0
    %118 = vmatpush1.bf16.msra.mxu0 0
    %119 = vmatprep.subr.bf16.mxu0 0
    %120 = vmatpush1.bf16.msra.mxu0 0
    %121 = vmatprep.subr.bf16.mxu0 0
    %122 = vmatpush1.bf16.msra.mxu0 0
    %123 = vmatprep.subr.bf16.mxu0 0
    %124 = vmatpush1.bf16.msra.mxu0 0
    %125 = vmatprep.subr.bf16.mxu0 0
    %126 = vmatpush1.bf16.msra.mxu0 0
    %127 = vmatprep.subr.bf16.mxu0 0
    %128 = vmatpush1.bf16.msra.mxu0 0
    %129 = vmatprep.subr.bf16.mxu0 0
    %130 = vmatpush1.bf16.msra.mxu0 0
    %131 = vmatprep.subr.bf16.mxu0 0
    %132 = vmatpush1.bf16.msra.mxu0 0
    %133 = vmatprep.subr.bf16.mxu0 0
    %134 = vmatpush1.bf16.msra.mxu0 0
    %135 = vmatprep.subr.bf16.mxu0 0
    %136 = vmatpush1.bf16.msra.mxu0 0
    %137 = vmatprep.subr.bf16.mxu0 0
    %138 = vmatpush1.bf16.msra.mxu0 0
    %139 = vmatprep.subr.bf16.mxu0 0
    %140 = vmatpush1.bf16.msra.mxu0 0
    %141 = vmatprep.mubr.bf16.mxu0 0
    %142 = vmatmul.mubr.bf16.gmra.mrb[0].mxu0 %v107
    %v143 = vpop.f32.mrb[0].mxu0
    %v144 = vadd.f32 %v78, %v143
    %v145 = vpop.f32.mrb[0].mxu0
    %v146 = vadd.f32 %v82, %v145
    %v147 = vpop.f32.mrb[0].mxu0
    %v148 = vpop.f32.mrb[0].mxu0
    %149 = vdwg.mxu0
    %vm150 = vcmp.gt.f32.partialorder %v144, 0.0
    %vm151 = vcmp.gt.f32.partialorder %v146, 0.0
    %v152 = vmul.f32 %v144, 0.2
    %v153 = vmul.f32 %v146, 0.2
    %v154 = vsel %vm150, %v144, %v152
    %v155 = vsel %vm151, %v146, %v153
    %v156 = vpack.c.bf16 %v154, %v154
    %v157 = vpack.c.bf16 %v155, %v155
    %v158 = vld [vmem:[#allocation7] sm:$0xf]
    %v159 = vld [vmem:[#allocation7 + $0x4] sm:$0xf]
    %v160 = vld [vmem:[#allocation7 + $0x8] sm:$0xf]
    %v161 = vld [vmem:[#allocation7 + $0xc] sm:$0xf]
    %v162 = vld [vmem:[#allocation7 + $0x10] sm:$0xf]
    %v163 = vld [vmem:[#allocation7 + $0x14] sm:$0xf]
    %v164 = vld [vmem:[#allocation7 + $0x18] sm:$0xf]
    %v165 = vld [vmem:[#allocation7 + $0x1c] sm:$0xf]
    %v166 = vld [vmem:[#allocation7 + $0x20] sm:$0xf]
    %v167 = vld [vmem:[#allocation7 + $0x24] sm:$0xf]
    %v168 = vld [vmem:[#allocation7 + $0x28] sm:$0xf]
    %v169 = vld [vmem:[#allocation7 + $0x2c] sm:$0xf]
    %v170 = vld [vmem:[#allocation7 + $0x30] sm:$0xf]
    %v171 = vld [vmem:[#allocation7 + $0x34] sm:$0xf]
    %v172 = vld [vmem:[#allocation7 + $0x38] sm:$0xf]
    %v173 = vld [vmem:[#allocation7 + $0x3c] sm:$0xf]
    %v174 = vld [vmem:[#allocation7 + $0x40] sm:$0xf]
    %v175 = vld [vmem:[#allocation7 + $0x44] sm:$0xf]
    %v176 = vld [vmem:[#allocation7 + $0x48] sm:$0xf]
    %v177 = vld [vmem:[#allocation7 + $0x4c] sm:$0xf]
    %v178 = vld [vmem:[#allocation7 + $0x50] sm:$0xf]
    %v179 = vld [vmem:[#allocation7 + $0x54] sm:$0xf]
    %v180 = vld [vmem:[#allocation7 + $0x58] sm:$0xf]
    %v181 = vld [vmem:[#allocation7 + $0x5c] sm:$0xf]
    %v182 = vld [vmem:[#allocation7 + $0x60] sm:$0xf]
    %v183 = vld [vmem:[#allocation7 + $0x64] sm:$0xf]
    %v184 = vld [vmem:[#allocation7 + $0x68] sm:$0xf]
    %v185 = vld [vmem:[#allocation7 + $0x6c] sm:$0xf]
    %v186 = vld [vmem:[#allocation7 + $0x70] sm:$0xf]
    %v187 = vld [vmem:[#allocation7 + $0x74] sm:$0xf]
    %v188 = vld [vmem:[#allocation7 + $0x78] sm:$0xf]
    %v189 = vld [vmem:[#allocation7 + $0x7c] sm:$0xf]
    %v190 = vld [vmem:[%s4] sm:$0x1]
    %v192 = vlaneseq
    %v193 = vshrl.u32 %v192, 7
    %v194 = vsub.s32 0, %v193
    %v195 = vrot.slane %v190, %v194
    %v229 = vunpack.c.l.b16 %v158
    %v230 = vunpack.c.l.b16 %v159
    %v231 = vunpack.c.l.b16 %v160
    %v232 = vunpack.c.l.b16 %v161
    %v233 = vunpack.c.l.b16 %v162
    %v234 = vunpack.c.l.b16 %v163
    %v235 = vunpack.c.l.b16 %v164
    %v236 = vunpack.c.l.b16 %v165
    %v237 = vunpack.c.l.b16 %v166
    %v238 = vunpack.c.l.b16 %v167
    %v239 = vunpack.c.l.b16 %v168
    %v240 = vunpack.c.l.b16 %v169
    %v241 = vunpack.c.l.b16 %v170
    %v242 = vunpack.c.l.b16 %v171
    %v243 = vunpack.c.l.b16 %v172
    %v244 = vunpack.c.l.b16 %v173
    %v245 = vunpack.c.l.b16 %v174
    %v246 = vunpack.c.l.b16 %v175
    %v247 = vunpack.c.l.b16 %v176
    %v248 = vunpack.c.l.b16 %v177
    %v249 = vunpack.c.l.b16 %v178
    %v250 = vunpack.c.l.b16 %v179
    %v251 = vunpack.c.l.b16 %v180
    %v252 = vunpack.c.l.b16 %v181
    %v253 = vunpack.c.l.b16 %v182
    %v254 = vunpack.c.l.b16 %v183
    %v255 = vunpack.c.l.b16 %v184
    %v256 = vunpack.c.l.b16 %v185
    %v257 = vunpack.c.l.b16 %v186
    %v258 = vunpack.c.l.b16 %v187
    %v259 = vunpack.c.l.b16 %v188
    %v260 = vunpack.c.l.b16 %v189
    %v261 = vpack.c.b16 %v230, %v229
    %v262 = vpack.c.b16 %v232, %v231
    %v263 = vpack.c.b16 %v234, %v233
    %v264 = vpack.c.b16 %v236, %v235
    %v265 = vpack.c.b16 %v238, %v237
    %v266 = vpack.c.b16 %v240, %v239
    %v267 = vpack.c.b16 %v242, %v241
    %v268 = vpack.c.b16 %v244, %v243
    %v269 = vpack.c.b16 %v246, %v245
    %v270 = vpack.c.b16 %v248, %v247
    %v271 = vpack.c.b16 %v250, %v249
    %v272 = vpack.c.b16 %v252, %v251
    %v273 = vpack.c.b16 %v254, %v253
    %v274 = vpack.c.b16 %v256, %v255
    %v275 = vpack.c.b16 %v258, %v257
    %v276 = vpack.c.b16 %v260, %v259
    %293 = vmatprep.subr.bf16.mxu0 0
    %294 = vmatpush1.bf16.msra.mxu0 %v261
    %295 = vmatprep.subr.bf16.mxu0 0
    %296 = vmatpush1.bf16.msra.mxu0 %v262
    %297 = vmatprep.subr.bf16.mxu0 0
    %298 = vmatpush1.bf16.msra.mxu0 %v263
    %299 = vmatprep.subr.bf16.mxu0 0
    %300 = vmatpush1.bf16.msra.mxu0 %v264
    %301 = vmatprep.subr.bf16.mxu0 0
    %302 = vmatpush1.bf16.msra.mxu0 %v265
    %303 = vmatprep.subr.bf16.mxu0 0
    %304 = vmatpush1.bf16.msra.mxu0 %v266
    %305 = vmatprep.subr.bf16.mxu0 0
    %306 = vmatpush1.bf16.msra.mxu0 %v267
    %307 = vmatprep.subr.bf16.mxu0 0
    %308 = vmatpush1.bf16.msra.mxu0 %v268
    %309 = vmatprep.subr.bf16.mxu0 0
    %310 = vmatpush1.bf16.msra.mxu0 %v269
    %311 = vmatprep.subr.bf16.mxu0 0
    %312 = vmatpush1.bf16.msra.mxu0 %v270
    %313 = vmatprep.subr.bf16.mxu0 0
    %314 = vmatpush1.bf16.msra.mxu0 %v271
    %315 = vmatprep.subr.bf16.mxu0 0
    %316 = vmatpush1.bf16.msra.mxu0 %v272
    %317 = vmatprep.subr.bf16.mxu0 0
    %318 = vmatpush1.bf16.msra.mxu0 %v273
    %319 = vmatprep.subr.bf16.mxu0 0
    %320 = vmatpush1.bf16.msra.mxu0 %v274
    %321 = vmatprep.subr.bf16.mxu0 0
    %322 = vmatpush1.bf16.msra.mxu0 %v275
    %323 = vmatprep.subr.bf16.mxu0 0
    %324 = vmatpush1.bf16.msra.mxu0 %v276
    %325 = vmatprep.mubr.bf16.mxu0 %v157
    %326 = vmatmul.mubr.bf16.gmra.mrb[0].mxu0 %v156
    %v327 = vpop.f32.mrb[0].mxu0
    %v328 = vadd.f32 %v195, %v327
    %v329 = vpop.f32.mrb[0].mxu0
    %v330 = vpop.f32.mrb[0].mxu0
    %v331 = vpop.f32.mrb[0].mxu0
    %332 = vdwg.mxu0
    %vm333 = vcmp.gt.f32.partialorder %v328, 0.0
    %v334 = vmul.f32 %v328, 0.2
    %v335 = vsel %vm333, %v328, %v334
    %v336 = vld [vmem:[%s5] sm:$0x1]
    %v338 = vlaneseq
    %v339 = vshrl.u32 %v338, 7
    %v340 = vsub.s32 0, %v339
    %v341 = vrot.slane %v336, %v340
    %v343 = vmul.f32 %v335, %v341
    %344 = vadd.xlane.f32.xlu0 %v343
    %v345 = vpop.xlane.xlu0 %344
    %s346 = sld [smem:[#allocation2]]
    %v347 = vstv %s346
    %v348 = vadd.f32 %v345, %v347
    %v349 = vxor.u32 %v348, 2147483648
    %v350 = vmul.f32 %v349, 1.442695
    %v351 = vpow.pop %v350
    %v352 = vadd.f32 %v351, 1.0
    %v353 = vrcp.pop %v352
    %v354 = vmul.f32 1.0, %v353
    %vm355 = vcmask 7168
    %356 = vst.msk [vmem:[%s7] sm:$0xff] %vm355, %v354
    // Predicated region
    $region42: #{tpu_custom_call.1} parent=1 // pred_check
      _
    $region43: #{tpu_custom_call.1} parent=1 // pred_check_branch
      %358 = sbr.rel (0) target = $region45
    $region44: #{tpu_custom_call.1} parent=1 // pred_region
      _
    $region45: #{tpu_custom_call.1} parent=1 // pred_fallthru
      _
    // Predicated region
    $region46: #{tpu_custom_call.1} parent=1 // pred_check
      _
    $region47: #{tpu_custom_call.1} parent=1 // pred_check_branch
      %360 = sbr.rel (0) target = $region49
    $region48: #{tpu_custom_call.1} parent=1 // pred_region
      _
    $region49: #{tpu_custom_call.1} parent=1 // pred_fallthru
      _
    %361 = vsyncpa [#allocation4], 1
    %362 = vsyncpa [#allocation6], 1

</llo_original>
